<compile_context>
chip_gen: v5e
topology: v5e:2x2
jax: 0.10.0
libtpu: 0.0.40
codegen_flags: <defaults>
</compile_context>

<pallas_src>
import functools

import jax
import jax.numpy as jnp
from jax.experimental import pallas as pl
from jax.experimental.pallas import tpu as pltpu


def _round_up(n, m):
    return ((n + m - 1) // m) * m


def rankup_kernel(x_ref, w1_ref, b1_ref, w2_ref, b2_ref,
                  wr_ref, br_ref, wk_ref, bk_ref,
                  reg_ref, rank_ref):
    # enc: Linear(d_in, hid) -> ReLU -> (Dropout: identity at inference)
    #      -> Linear(hid, hid) -> ReLU
    x = x_ref[...]  # already bf16
    h1 = jnp.dot(x, w1_ref[...], preferred_element_type=jnp.float32) + b1_ref[...]
    h1 = jnp.maximum(h1, 0.0).astype(jnp.bfloat16)

    h2 = jnp.dot(h1, w2_ref[...], preferred_element_type=jnp.float32) + b2_ref[...]
    h2 = jnp.maximum(h2, 0.0).astype(jnp.bfloat16)

    # Two narrow heads: reg (hid -> d_out) and rank (hid -> 2).  MXU cost is
    # irrelevant at this roofline point; narrow outputs minimize HBM writeback.
    reg_ref[...] = (jnp.dot(h2, wr_ref[...], preferred_element_type=jnp.float32)
                    + br_ref[...]).astype(reg_ref.dtype)
    rank_ref[...] = (jnp.dot(h2, wk_ref[...], preferred_element_type=jnp.float32)
                     + bk_ref[...]).astype(rank_ref.dtype)


@functools.partial(jax.jit, static_argnames=("tile_b",))
def rankup_forward(x, params, tile_b=2048):
    B, d_in = x.shape
    hid = params["w1"].shape[1]
    d_out = params["wr"].shape[1]

    # Pad batch only to a multiple of 8 (sublane); ragged last tile handled by grid.
    B_p = _round_up(B, 8)
    tile_b = max(8, _round_up(min(tile_b, B_p), 8))
    # v7x megacore: keep at least 2 batch tiles when the batch is big enough so the
    # "parallel" axis actually spans both TensorCores.
    if B_p >= 16:
        tile_b = min(tile_b, _round_up((B_p + 1) // 2, 8))
    grid = (pl.cdiv(B_p, tile_b),)

    # --- pack operands (once per call, outside the kernel) --------------------
    x_bf = x.astype(jnp.bfloat16)
    if B_p != B:
        x_bf = jnp.pad(x_bf, ((0, B_p - B), (0, 0)))

    w1 = params["w1"].astype(jnp.bfloat16)          # (d_in, hid)
    w2 = params["w2"].astype(jnp.bfloat16)          # (hid, hid)
    wr = params["wr"].astype(jnp.bfloat16)          # (hid, d_out)
    wk = params["wk"].astype(jnp.bfloat16)          # (hid, 2)
    b1, b2, br, bk = params["b1"], params["b2"], params["br"], params["bk"]  # f32

    def resident(shape):
        # Same block every grid step -> stays resident in VMEM.
        return pl.BlockSpec(shape, lambda i: (0, 0))

    # VMEM budget: double-buffered x/out tiles + resident weights + f32 temporaries.
    w_bytes = 2 * ((d_in + hid + d_out + 2) * hid * 2 + (2 * hid + d_out + 2) * 4)
    io_bytes = 2 * (tile_b * d_in * 2 + tile_b * (d_out + 2) * 4)
    inter_bytes = 2 * tile_b * hid * 4
    vmem_limit = int(min(48 << 20, max(16 << 20, 2 * (w_bytes + io_bytes + inter_bytes))))

    cost = pl.CostEstimate(
        flops=2 * B_p * hid * (d_in + hid + d_out + 2),
        transcendentals=0,
        bytes_accessed=(B_p * d_in * 2                      # x (bf16)
                        + (d_in + hid + d_out + 2) * hid * 2  # weights (bf16)
                        + B_p * (d_out + 2) * 4),             # outputs (f32)
    )

    reg_p, rank_p = pl.pallas_call(
        rankup_kernel,
        out_shape=(jax.ShapeDtypeStruct((B_p, d_out), jnp.float32),
                   jax.ShapeDtypeStruct((B_p, 2), jnp.float32)),
        grid=grid,
        in_specs=[
            pl.BlockSpec((tile_b, d_in), lambda i: (i, 0)),   # x tile (bf16, unpadded K)
            resident((d_in, hid)),                            # w1
            resident((1, hid)),                               # b1
            resident((hid, hid)),                             # w2
            resident((1, hid)),                               # b2
            resident((hid, d_out)),                           # wr
            resident((1, d_out)),                             # br
            resident((hid, 2)),                               # wk
            resident((1, 2)),                                 # bk
        ],
        out_specs=(
            pl.BlockSpec((tile_b, d_out), lambda i: (i, 0)),  # reg (narrow writeback)
            pl.BlockSpec((tile_b, 2), lambda i: (i, 0)),      # rank (narrow writeback)
        ),
        compiler_params=pltpu.CompilerParams(
            dimension_semantics=("parallel",),   # batch tiles split across TCs (v7x)
            vmem_limit_bytes=vmem_limit,
        ),
        cost_estimate=cost,
    )(x_bf, w1, b1, w2, b2, wr, br, wk, bk)

    return reg_p[:B], rank_p[:B]


def init_params(key, d_in, d_out, hid=128):
    """PyTorch-style Linear init; weights stored as (in, out) so kernel does x @ W."""
    def linear(k, fan_in, fan_out):
        kw, kb = jax.random.split(k)
        bound = 1.0 / jnp.sqrt(fan_in)
        w = jax.random.uniform(kw, (fan_in, fan_out), jnp.float32, -bound, bound)
        b = jax.random.uniform(kb, (1, fan_out), jnp.float32, -bound, bound)
        return w, b

    k1, k2, k3, k4 = jax.random.split(key, 4)
    w1, b1 = linear(k1, d_in, hid)
    w2, b2 = linear(k2, hid, hid)
    wr, br = linear(k3, hid, d_out)
    wk, bk = linear(k4, hid, 2)
    return {"w1": w1, "b1": b1, "w2": w2, "b2": b2,
            "wr": wr, "br": br, "wk": wk, "bk": bk}


def reference_forward(x, p):
    # Same numerics as the kernel: bf16 matmul inputs, f32 accumulation, f32 bias.
    def dotf(a, w):
        return jnp.dot(a.astype(jnp.bfloat16), w.astype(jnp.bfloat16),
                       preferred_element_type=jnp.float32)
    h = jnp.maximum(dotf(x, p["w1"]) + p["b1"], 0.0)
    h = jnp.maximum(dotf(h, p["w2"]) + p["b2"], 0.0)
    return dotf(h, p["wr"]) + p["br"], dotf(h, p["wk"]) + p["bk"]


if __name__ == "__main__":
    d_in, hid, d_out = 32, 128, 4
    key = jax.random.PRNGKey(0)
    kx, kp, kx2, kx3 = jax.random.split(key, 4)
    params = init_params(kp, d_in, d_out, hid)

    # Small canonical case (single tile).
    B = 8
    x = jax.random.normal(kx, (B, d_in), jnp.float32)
    reg, rank = rankup_forward(x, params)
    jax.block_until_ready((reg, rank))
    reg_ref, rank_ref = reference_forward(x, params)
    assert reg.shape == (B, d_out) and rank.shape == (B, 2)
    assert jnp.allclose(reg, reg_ref, atol=2e-3, rtol=2e-3)
    assert jnp.allclose(rank, rank_ref, atol=2e-3, rtol=2e-3)

    # Ragged batch with small tiles (exercises multi-step grid + masked last tile).
    B2 = 37
    x2 = jax.random.normal(kx2, (B2, d_in), jnp.float32)
    reg2, rank2 = rankup_forward(x2, params, tile_b=16)
    jax.block_until_ready((reg2, rank2))
    reg2_ref, rank2_ref = reference_forward(x2, params)
    assert reg2.shape == (B2, d_out) and rank2.shape == (B2, 2)
    assert jnp.allclose(reg2, reg2_ref, atol=2e-3, rtol=2e-3)
    assert jnp.allclose(rank2, rank2_ref, atol=2e-3, rtol=2e-3)

    # Larger batch at the default tile size (exercises the >=2-tile megacore cap).
    B3 = 300
    x3 = jax.random.normal(kx3, (B3, d_in), jnp.float32)
    reg3, rank3 = rankup_forward(x3, params)
    jax.block_until_ready((reg3, rank3))
    reg3_ref, rank3_ref = reference_forward(x3, params)
    assert reg3.shape == (B3, d_out) and rank3.shape == (B3, 2)
    assert jnp.allclose(reg3, reg3_ref, atol=2e-3, rtol=2e-3)
    assert jnp.allclose(rank3, rank3_ref, atol=2e-3, rtol=2e-3)

    print("KERNEL_OK")
</pallas_src>

<mosaic_0001>
module attributes {stable_mosaic.version = 11 : i64} {
  func.func @rankup_kernel(%arg0: i32, %arg1: memref<8x32xbf16, #tpu.memory_space<vmem>>, %arg2: memref<32x128xbf16, #tpu.memory_space<vmem>>, %arg3: memref<1x128xf32, #tpu.memory_space<vmem>>, %arg4: memref<128x128xbf16, #tpu.memory_space<vmem>>, %arg5: memref<1x128xf32, #tpu.memory_space<vmem>>, %arg6: memref<128x4xbf16, #tpu.memory_space<vmem>>, %arg7: memref<1x4xf32, #tpu.memory_space<vmem>>, %arg8: memref<128x2xbf16, #tpu.memory_space<vmem>>, %arg9: memref<1x2xf32, #tpu.memory_space<vmem>>, %arg10: memref<8x4xf32, #tpu.memory_space<vmem>>, %arg11: memref<8x2xf32, #tpu.memory_space<vmem>>) attributes {dimension_semantics = [#tpu.dimension_semantics<parallel>], iteration_bounds = array<i64: 1>, scalar_prefetch = 0 : i64, scratch_operands = 0 : i64, tpu.core_type = #tpu.core_type<tc>, window_params = [{transform_indices = @transform_0, window_bounds = array<i64: 8, 32>}, {pipeline_mode = #tpu.pipeline_mode<synchronous>, transform_indices = @transform_1, window_bounds = array<i64: 32, 128>}, {pipeline_mode = #tpu.pipeline_mode<synchronous>, transform_indices = @transform_2, window_bounds = array<i64: 1, 128>}, {pipeline_mode = #tpu.pipeline_mode<synchronous>, transform_indices = @transform_3, window_bounds = array<i64: 128, 128>}, {pipeline_mode = #tpu.pipeline_mode<synchronous>, transform_indices = @transform_4, window_bounds = array<i64: 1, 128>}, {pipeline_mode = #tpu.pipeline_mode<synchronous>, transform_indices = @transform_5, window_bounds = array<i64: 128, 4>}, {pipeline_mode = #tpu.pipeline_mode<synchronous>, transform_indices = @transform_6, window_bounds = array<i64: 1, 4>}, {pipeline_mode = #tpu.pipeline_mode<synchronous>, transform_indices = @transform_7, window_bounds = array<i64: 128, 2>}, {pipeline_mode = #tpu.pipeline_mode<synchronous>, transform_indices = @transform_8, window_bounds = array<i64: 1, 2>}, {transform_indices = @transform_9, window_bounds = array<i64: 8, 4>}, {transform_indices = @transform_10, window_bounds = array<i64: 8, 2>}]} {
    %c0 = arith.constant 0 : index
    %c0_0 = arith.constant 0 : index
    %0 = vector.load %arg1[%c0, %c0_0] : memref<8x32xbf16, #tpu.memory_space<vmem>>, vector<8x32xbf16>
    %c0_1 = arith.constant 0 : index
    %c0_2 = arith.constant 0 : index
    %1 = vector.load %arg2[%c0_1, %c0_2] : memref<32x128xbf16, #tpu.memory_space<vmem>>, vector<32x128xbf16>
    %cst = arith.constant dense<0.000000e+00> : vector<8x128xf32>
    %2 = tpu.matmul %0, %1, %cst {dimension_numbers = #tpu.dot_dimension_numbers<[1], [0], [0], [1], [0, 0, 1, 1], [], []>} : vector<8x32xbf16>, vector<32x128xbf16>, vector<8x128xf32> -> vector<8x128xf32>
    %c0_3 = arith.constant 0 : index
    %c0_4 = arith.constant 0 : index
    %3 = vector.load %arg3[%c0_3, %c0_4] : memref<1x128xf32, #tpu.memory_space<vmem>>, vector<1x128xf32>
    %4 = vector.broadcast %3 : vector<1x128xf32> to vector<8x128xf32>
    %5 = arith.addf %2, %4 : vector<8x128xf32>
    %cst_5 = arith.constant 0.000000e+00 : f32
    %6 = vector.broadcast %cst_5 : f32 to vector<8x128xf32>
    %7 = arith.maximumf %5, %6 : vector<8x128xf32>
    %8 = arith.truncf %7 : vector<8x128xf32> to vector<8x128xbf16>
    %c0_6 = arith.constant 0 : index
    %c0_7 = arith.constant 0 : index
    %9 = vector.load %arg4[%c0_6, %c0_7] : memref<128x128xbf16, #tpu.memory_space<vmem>>, vector<128x128xbf16>
    %cst_8 = arith.constant dense<0.000000e+00> : vector<8x128xf32>
    %10 = tpu.matmul %8, %9, %cst_8 {dimension_numbers = #tpu.dot_dimension_numbers<[1], [0], [0], [1], [0, 0, 1, 1], [], []>} : vector<8x128xbf16>, vector<128x128xbf16>, vector<8x128xf32> -> vector<8x128xf32>
    %c0_9 = arith.constant 0 : index
    %c0_10 = arith.constant 0 : index
    %11 = vector.load %arg5[%c0_9, %c0_10] : memref<1x128xf32, #tpu.memory_space<vmem>>, vector<1x128xf32>
    %12 = vector.broadcast %11 : vector<1x128xf32> to vector<8x128xf32>
    %13 = arith.addf %10, %12 : vector<8x128xf32>
    %cst_11 = arith.constant 0.000000e+00 : f32
    %14 = vector.broadcast %cst_11 : f32 to vector<8x128xf32>
    %15 = arith.maximumf %13, %14 : vector<8x128xf32>
    %16 = arith.truncf %15 : vector<8x128xf32> to vector<8x128xbf16>
    %c0_12 = arith.constant 0 : index
    %c0_13 = arith.constant 0 : index
    %17 = vector.load %arg6[%c0_12, %c0_13] : memref<128x4xbf16, #tpu.memory_space<vmem>>, vector<128x4xbf16>
    %cst_14 = arith.constant dense<0.000000e+00> : vector<8x4xf32>
    %18 = tpu.matmul %16, %17, %cst_14 {dimension_numbers = #tpu.dot_dimension_numbers<[1], [0], [0], [1], [0, 0, 1, 1], [], []>} : vector<8x128xbf16>, vector<128x4xbf16>, vector<8x4xf32> -> vector<8x4xf32>
    %c0_15 = arith.constant 0 : index
    %c0_16 = arith.constant 0 : index
    %19 = vector.load %arg7[%c0_15, %c0_16] : memref<1x4xf32, #tpu.memory_space<vmem>>, vector<1x4xf32>
    %20 = vector.broadcast %19 : vector<1x4xf32> to vector<8x4xf32>
    %21 = arith.addf %18, %20 : vector<8x4xf32>
    %c0_17 = arith.constant 0 : index
    %c0_18 = arith.constant 0 : index
    %22 = vector.load %arg10[%c0_17, %c0_18] : memref<8x4xf32, #tpu.memory_space<vmem>>, vector<8x4xf32>
    tpu.vector_store %arg10[%c0_17, %c0_18], %21 {strides = array<i32>} : memref<8x4xf32, #tpu.memory_space<vmem>>, vector<8x4xf32>,
    %c0_19 = arith.constant 0 : index
    %c0_20 = arith.constant 0 : index
    %23 = vector.load %arg8[%c0_19, %c0_20] : memref<128x2xbf16, #tpu.memory_space<vmem>>, vector<128x2xbf16>
    %cst_21 = arith.constant dense<0.000000e+00> : vector<8x2xf32>
    %24 = tpu.matmul %16, %23, %cst_21 {dimension_numbers = #tpu.dot_dimension_numbers<[1], [0], [0], [1], [0, 0, 1, 1], [], []>} : vector<8x128xbf16>, vector<128x2xbf16>, vector<8x2xf32> -> vector<8x2xf32>
    %c0_22 = arith.constant 0 : index
    %c0_23 = arith.constant 0 : index
    %25 = vector.load %arg9[%c0_22, %c0_23] : memref<1x2xf32, #tpu.memory_space<vmem>>, vector<1x2xf32>
    %26 = vector.broadcast %25 : vector<1x2xf32> to vector<8x2xf32>
    %27 = arith.addf %24, %26 : vector<8x2xf32>
    %c0_24 = arith.constant 0 : index
    %c0_25 = arith.constant 0 : index
    %28 = vector.load %arg11[%c0_24, %c0_25] : memref<8x2xf32, #tpu.memory_space<vmem>>, vector<8x2xf32>
    tpu.vector_store %arg11[%c0_24, %c0_25], %27 {strides = array<i32>} : memref<8x2xf32, #tpu.memory_space<vmem>>, vector<8x2xf32>,
    return
  }
  func.func @transform_0(%arg0: i32) -> (i32, i32) {
    %c0_i32 = arith.constant 0 : i32
    %c0_i32_0 = arith.constant 0 : i32
    return %arg0, %c0_i32 : i32, i32
  }
  func.func @transform_1(%arg0: i32) -> (i32, i32) {
    %c0_i32 = arith.constant 0 : i32
    %c0_i32_0 = arith.constant 0 : i32
    %c0_i32_1 = arith.constant 0 : i32
    return %c0_i32, %c0_i32_0 : i32, i32
  }
  func.func @transform_2(%arg0: i32) -> (i32, i32) {
    %c0_i32 = arith.constant 0 : i32
    %c0_i32_0 = arith.constant 0 : i32
    %c0_i32_1 = arith.constant 0 : i32
    return %c0_i32, %c0_i32_0 : i32, i32
  }
  func.func @transform_3(%arg0: i32) -> (i32, i32) {
    %c0_i32 = arith.constant 0 : i32
    %c0_i32_0 = arith.constant 0 : i32
    %c0_i32_1 = arith.constant 0 : i32
    return %c0_i32, %c0_i32_0 : i32, i32
  }
  func.func @transform_4(%arg0: i32) -> (i32, i32) {
    %c0_i32 = arith.constant 0 : i32
    %c0_i32_0 = arith.constant 0 : i32
    %c0_i32_1 = arith.constant 0 : i32
    return %c0_i32, %c0_i32_0 : i32, i32
  }
  func.func @transform_5(%arg0: i32) -> (i32, i32) {
    %c0_i32 = arith.constant 0 : i32
    %c0_i32_0 = arith.constant 0 : i32
    %c0_i32_1 = arith.constant 0 : i32
    return %c0_i32, %c0_i32_0 : i32, i32
  }
  func.func @transform_6(%arg0: i32) -> (i32, i32) {
    %c0_i32 = arith.constant 0 : i32
    %c0_i32_0 = arith.constant 0 : i32
    %c0_i32_1 = arith.constant 0 : i32
    return %c0_i32, %c0_i32_0 : i32, i32
  }
  func.func @transform_7(%arg0: i32) -> (i32, i32) {
    %c0_i32 = arith.constant 0 : i32
    %c0_i32_0 = arith.constant 0 : i32
    %c0_i32_1 = arith.constant 0 : i32
    return %c0_i32, %c0_i32_0 : i32, i32
  }
  func.func @transform_8(%arg0: i32) -> (i32, i32) {
    %c0_i32 = arith.constant 0 : i32
    %c0_i32_0 = arith.constant 0 : i32
    %c0_i32_1 = arith.constant 0 : i32
    return %c0_i32, %c0_i32_0 : i32, i32
  }
  func.func @transform_9(%arg0: i32) -> (i32, i32) {
    %c0_i32 = arith.constant 0 : i32
    %c0_i32_0 = arith.constant 0 : i32
    return %arg0, %c0_i32 : i32, i32
  }
  func.func @transform_10(%arg0: i32) -> (i32, i32) {
    %c0_i32 = arith.constant 0 : i32
    %c0_i32_0 = arith.constant 0 : i32
    return %arg0, %c0_i32 : i32, i32
  }
}

</mosaic_0001>

<llo_original>
// kernel: rankup_forward.1
$region0: #{rankup_forward.1}
  #allocation0 [shape = 'u32[]', space=smem, size = 0x4, offset = 0x4, fixed_abs, tag = 'smem constant byte address 0x4 - core index']
  #allocation1 [shape = 'u32[72,128]{1,0:T(1,128)}', space=vmem, size = 0x9000, scoped, tag = 'internal scratch']
  %s0 = inlined_call_operand.vmem [shape: bf16[8,32], index: 0, kind: input, shape index: {}]
  %s1 = inlined_call_operand.vmem [shape: bf16[32,128], index: 1, kind: input, shape index: {}]
  %s2 = inlined_call_operand.vmem [shape: f32[1,128], index: 2, kind: input, shape index: {}]
  %s3 = inlined_call_operand.vmem [shape: bf16[128,128], index: 3, kind: input, shape index: {}]
  %s4 = inlined_call_operand.vmem [shape: f32[1,128], index: 4, kind: input, shape index: {}]
  %s5 = inlined_call_operand.vmem [shape: bf16[128,4], index: 5, kind: input, shape index: {}]
  %s6 = inlined_call_operand.vmem [shape: f32[1,4], index: 6, kind: input, shape index: {}]
  %s7 = inlined_call_operand.vmem [shape: bf16[128,2], index: 7, kind: input, shape index: {}]
  %s8 = inlined_call_operand.vmem [shape: f32[1,2], index: 8, kind: input, shape index: {}]
  %s9 = inlined_call_operand.vmem [shape: f32[8,4], index: 9, kind: output, shape index: {0}]
  %s10 = inlined_call_operand.vmem [shape: f32[8,2], index: 10, kind: output, shape index: {1}]
  %11 = xla_tuple %s9, %s10
  %s12 = sld [smem:[#allocation0]]
  $region54: #{rankup_forward.1} parent=0
    _
  %s14 = ssub.s32 1, %s12
  %s15 = scalar_select 0, %s14, %s12
  // Predicated region
  $region2: #{rankup_forward.1} parent=0 // pred_check
    _
  $region3: #{rankup_forward.1} parent=0 // pred_check_branch
    %17 = sbr.rel (0) target = $region5
  $region4: #{rankup_forward.1} parent=0 // pred_region
    _
  $region5: #{rankup_forward.1} parent=0 // pred_fallthru
    _
  // Predicated region
  $region6: #{rankup_forward.1} parent=0 // pred_check
    _
  $region7: #{rankup_forward.1} parent=0 // pred_check_branch
    %19 = sbr.rel (0) target = $region9
  $region8: #{rankup_forward.1} parent=0 // pred_region
    _
  $region9: #{rankup_forward.1} parent=0 // pred_fallthru
    _
  // Predicated region
  $region10: #{rankup_forward.1} parent=0 // pred_check
    _
  $region11: #{rankup_forward.1} parent=0 // pred_check_branch
    %21 = sbr.rel (0) target = $region13
  $region12: #{rankup_forward.1} parent=0 // pred_region
    _
  $region13: #{rankup_forward.1} parent=0 // pred_fallthru
    _
  // Predicated region
  $region14: #{rankup_forward.1} parent=0 // pred_check
    _
  $region15: #{rankup_forward.1} parent=0 // pred_check_branch
    %23 = sbr.rel (0) target = $region17
  $region16: #{rankup_forward.1} parent=0 // pred_region
    _
  $region17: #{rankup_forward.1} parent=0 // pred_fallthru
    _
  // Predicated region
  $region18: #{rankup_forward.1} parent=0 // pred_check
    _
  $region19: #{rankup_forward.1} parent=0 // pred_check_branch
    %25 = sbr.rel (0) target = $region21
  $region20: #{rankup_forward.1} parent=0 // pred_region
    _
  $region21: #{rankup_forward.1} parent=0 // pred_fallthru
    _
  // Predicated region
  $region22: #{rankup_forward.1} parent=0 // pred_check
    _
  $region23: #{rankup_forward.1} parent=0 // pred_check_branch
    %27 = sbr.rel (0) target = $region25
  $region24: #{rankup_forward.1} parent=0 // pred_region
    _
  $region25: #{rankup_forward.1} parent=0 // pred_fallthru
    _
  // Predicated region
  $region26: #{rankup_forward.1} parent=0 // pred_check
    _
  $region27: #{rankup_forward.1} parent=0 // pred_check_branch
    %29 = sbr.rel (0) target = $region29
  $region28: #{rankup_forward.1} parent=0 // pred_region
    _
  $region29: #{rankup_forward.1} parent=0 // pred_fallthru
    _
  // Predicated region
  $region30: #{rankup_forward.1} parent=0 // pred_check
    _
  $region31: #{rankup_forward.1} parent=0 // pred_check_branch
    %31 = sbr.rel (0) target = $region33
  $region32: #{rankup_forward.1} parent=0 // pred_region
    _
  $region33: #{rankup_forward.1} parent=0 // pred_fallthru
    _
  // Predicated region
  $region34: #{rankup_forward.1} parent=0 // pred_check
    _
  $region35: #{rankup_forward.1} parent=0 // pred_check_branch
    %33 = sbr.rel (0) target = $region37
  $region36: #{rankup_forward.1} parent=0 // pred_region
    _
  $region37: #{rankup_forward.1} parent=0 // pred_fallthru
    _
  %v35 = vld [vmem:[%s0] sm:$0xf]
  %v36 = vld [vmem:[%s1] sm:$0xf]
  %v37 = vld [vmem:[%s1 + $0x4] sm:$0xf]
  %v38 = vld [vmem:[%s1 + $0x8] sm:$0xf]
  %v39 = vld [vmem:[%s1 + $0xc] sm:$0xf]
  %v40 = vld [vmem:[%s2] sm:$0x1]
  %v42 = vperm.slane %v40, 0
  %v48 = vunpack.c.l.b16 %v36
  %v49 = vunpack.c.l.b16 %v37
  %v50 = vunpack.c.l.b16 %v38
  %v51 = vunpack.c.l.b16 %v39
  %v52 = vpack.c.b16 %v49, %v48
  %v53 = vpack.c.b16 %v51, %v50
  %vm56 = vcmask 261120
  %v58 = vsel %vm56, %v35, 0
  %60 = vmatpush.bf16.msra.mxu0 0
  %61 = vmatpush.bf16.msra.mxu0 0
  %62 = vmatpush.bf16.msra.mxu0 0
  %63 = vmatpush.bf16.msra.mxu0 0
  %64 = vmatpush.bf16.msra.mxu0 0
  %65 = vmatpush.bf16.msra.mxu0 0
  %66 = vmatpush.bf16.msra.mxu0 %v53
  %67 = vmatpush.bf16.msra.mxu0 %v52
  %68 = vmatmul.bf16.gmra.mxu0 %v58
  %v69 = vpop.f32.mrf.mxu0
  %v70 = vadd.f32 %v42, %v69
  %v71 = vpop.f32.mrf.mxu0
  %72 = vdwg.mxu0
  %v73 = vmax.f32 %v70, 0.0
  %v74 = vpack.c.bf16 %v73, %v73
  %v75 = vld [vmem:[%s3] sm:$0xf]
  %v76 = vld [vmem:[%s3 + $0x4] sm:$0xf]
  %v77 = vld [vmem:[%s3 + $0x8] sm:$0xf]
  %v78 = vld [vmem:[%s3 + $0xc] sm:$0xf]
  %v79 = vld [vmem:[%s3 + $0x10] sm:$0xf]
  %v80 = vld [vmem:[%s3 + $0x14] sm:$0xf]
  %v81 = vld [vmem:[%s3 + $0x18] sm:$0xf]
  %v82 = vld [vmem:[%s3 + $0x1c] sm:$0xf]
  %v83 = vld [vmem:[%s3 + $0x20] sm:$0xf]
  %v84 = vld [vmem:[%s3 + $0x24] sm:$0xf]
  %v85 = vld [vmem:[%s3 + $0x28] sm:$0xf]
  %v86 = vld [vmem:[%s3 + $0x2c] sm:$0xf]
  %v87 = vld [vmem:[%s3 + $0x30] sm:$0xf]
  %v88 = vld [vmem:[%s3 + $0x34] sm:$0xf]
  %v89 = vld [vmem:[%s3 + $0x38] sm:$0xf]
  %v90 = vld [vmem:[%s3 + $0x3c] sm:$0xf]
  %v91 = vld [vmem:[%s4] sm:$0x1]
  %v93 = vperm.slane %v91, 0
  %v111 = vunpack.c.l.b16 %v75
  %v112 = vunpack.c.l.b16 %v76
  %v113 = vunpack.c.l.b16 %v77
  %v114 = vunpack.c.l.b16 %v78
  %v115 = vunpack.c.l.b16 %v79
  %v116 = vunpack.c.l.b16 %v80
  %v117 = vunpack.c.l.b16 %v81
  %v118 = vunpack.c.l.b16 %v82
  %v119 = vunpack.c.l.b16 %v83
  %v120 = vunpack.c.l.b16 %v84
  %v121 = vunpack.c.l.b16 %v85
  %v122 = vunpack.c.l.b16 %v86
  %v123 = vunpack.c.l.b16 %v87
  %v124 = vunpack.c.l.b16 %v88
  %v125 = vunpack.c.l.b16 %v89
  %v126 = vunpack.c.l.b16 %v90
  %v127 = vpack.c.b16 %v112, %v111
  %v128 = vpack.c.b16 %v114, %v113
  %v129 = vpack.c.b16 %v116, %v115
  %v130 = vpack.c.b16 %v118, %v117
  %v131 = vpack.c.b16 %v120, %v119
  %v132 = vpack.c.b16 %v122, %v121
  %v133 = vpack.c.b16 %v124, %v123
  %v134 = vpack.c.b16 %v126, %v125
  %143 = vmatpush.bf16.msra.mxu0 %v134
  %144 = vmatpush.bf16.msra.mxu0 %v133
  %145 = vmatpush.bf16.msra.mxu0 %v132
  %146 = vmatpush.bf16.msra.mxu0 %v131
  %147 = vmatpush.bf16.msra.mxu0 %v130
  %148 = vmatpush.bf16.msra.mxu0 %v129
  %149 = vmatpush.bf16.msra.mxu0 %v128
  %150 = vmatpush.bf16.msra.mxu0 %v127
  %151 = vmatmul.bf16.gmra.mxu0 %v74
  %v152 = vpop.f32.mrf.mxu0
  %v153 = vadd.f32 %v93, %v152
  %v154 = vpop.f32.mrf.mxu0
  %155 = vdwg.mxu0
  %v156 = vmax.f32 %v153, 0.0
  %v157 = vpack.c.bf16 %v156, %v156
  %v158 = vld [vmem:[%s5] sm:$0xf]
  %v159 = vld [vmem:[%s5 + $0x4] sm:$0xf]
  %v160 = vld [vmem:[%s5 + $0x8] sm:$0xf]
  %v161 = vld [vmem:[%s5 + $0xc] sm:$0xf]
  %v162 = vld [vmem:[%s5 + $0x10] sm:$0xf]
  %v163 = vld [vmem:[%s5 + $0x14] sm:$0xf]
  %v164 = vld [vmem:[%s5 + $0x18] sm:$0xf]
  %v165 = vld [vmem:[%s5 + $0x1c] sm:$0xf]
  %v166 = vld [vmem:[%s5 + $0x20] sm:$0xf]
  %v167 = vld [vmem:[%s5 + $0x24] sm:$0xf]
  %v168 = vld [vmem:[%s5 + $0x28] sm:$0xf]
  %v169 = vld [vmem:[%s5 + $0x2c] sm:$0xf]
  %v170 = vld [vmem:[%s5 + $0x30] sm:$0xf]
  %v171 = vld [vmem:[%s5 + $0x34] sm:$0xf]
  %v172 = vld [vmem:[%s5 + $0x38] sm:$0xf]
  %v173 = vld [vmem:[%s5 + $0x3c] sm:$0xf]
  %v174 = vld [vmem:[%s6] sm:$0x1]
  %v176 = vperm.slane %v174, 0
  %v194 = vunpack.c.l.b16 %v158
  %v195 = vunpack.c.l.b16 %v159
  %v196 = vunpack.c.l.b16 %v160
  %v197 = vunpack.c.l.b16 %v161
  %v198 = vunpack.c.l.b16 %v162
  %v199 = vunpack.c.l.b16 %v163
  %v200 = vunpack.c.l.b16 %v164
  %v201 = vunpack.c.l.b16 %v165
  %v202 = vunpack.c.l.b16 %v166
  %v203 = vunpack.c.l.b16 %v167
  %v204 = vunpack.c.l.b16 %v168
  %v205 = vunpack.c.l.b16 %v169
  %v206 = vunpack.c.l.b16 %v170
  %v207 = vunpack.c.l.b16 %v171
  %v208 = vunpack.c.l.b16 %v172
  %v209 = vunpack.c.l.b16 %v173
  %v210 = vpack.c.b16 %v195, %v194
  %v211 = vpack.c.b16 %v197, %v196
  %v212 = vpack.c.b16 %v199, %v198
  %v213 = vpack.c.b16 %v201, %v200
  %v214 = vpack.c.b16 %v203, %v202
  %v215 = vpack.c.b16 %v205, %v204
  %v216 = vpack.c.b16 %v207, %v206
  %v217 = vpack.c.b16 %v209, %v208
  %226 = vmatpush.bf16.msra.mxu0 %v217
  %227 = vmatpush.bf16.msra.mxu0 %v216
  %228 = vmatpush.bf16.msra.mxu0 %v215
  %229 = vmatpush.bf16.msra.mxu0 %v214
  %230 = vmatpush.bf16.msra.mxu0 %v213
  %231 = vmatpush.bf16.msra.mxu0 %v212
  %232 = vmatpush.bf16.msra.mxu0 %v211
  %233 = vmatpush.bf16.msra.mxu0 %v210
  %234 = vmatmul.bf16.gmra.mxu0 %v157
  %v235 = vpop.f32.mrf.mxu0
  %v236 = vadd.f32 %v176, %v235
  %v237 = vpop.f32.mrf.mxu0
  %238 = vdwg.mxu0
  %vm239 = vcmask 31744
  %240 = vst.msk [vmem:[%s9] sm:$0xff] %vm239, %v236
  %v241 = vld [vmem:[%s7] sm:$0xf]
  %v242 = vld [vmem:[%s7 + $0x4] sm:$0xf]
  %v243 = vld [vmem:[%s7 + $0x8] sm:$0xf]
  %v244 = vld [vmem:[%s7 + $0xc] sm:$0xf]
  %v245 = vld [vmem:[%s7 + $0x10] sm:$0xf]
  %v246 = vld [vmem:[%s7 + $0x14] sm:$0xf]
  %v247 = vld [vmem:[%s7 + $0x18] sm:$0xf]
  %v248 = vld [vmem:[%s7 + $0x1c] sm:$0xf]
  %v249 = vld [vmem:[%s7 + $0x20] sm:$0xf]
  %v250 = vld [vmem:[%s7 + $0x24] sm:$0xf]
  %v251 = vld [vmem:[%s7 + $0x28] sm:$0xf]
  %v252 = vld [vmem:[%s7 + $0x2c] sm:$0xf]
  %v253 = vld [vmem:[%s7 + $0x30] sm:$0xf]
  %v254 = vld [vmem:[%s7 + $0x34] sm:$0xf]
  %v255 = vld [vmem:[%s7 + $0x38] sm:$0xf]
  %v256 = vld [vmem:[%s7 + $0x3c] sm:$0xf]
  %v257 = vld [vmem:[%s8] sm:$0x1]
  %v259 = vperm.slane %v257, 0
  %v277 = vunpack.c.l.b16 %v241
  %v278 = vunpack.c.l.b16 %v242
  %v279 = vunpack.c.l.b16 %v243
  %v280 = vunpack.c.l.b16 %v244
  %v281 = vunpack.c.l.b16 %v245
  %v282 = vunpack.c.l.b16 %v246
  %v283 = vunpack.c.l.b16 %v247
  %v284 = vunpack.c.l.b16 %v248
  %v285 = vunpack.c.l.b16 %v249
  %v286 = vunpack.c.l.b16 %v250
  %v287 = vunpack.c.l.b16 %v251
  %v288 = vunpack.c.l.b16 %v252
  %v289 = vunpack.c.l.b16 %v253
  %v290 = vunpack.c.l.b16 %v254
  %v291 = vunpack.c.l.b16 %v255
  %v292 = vunpack.c.l.b16 %v256
  %v293 = vpack.c.b16 %v278, %v277
  %v294 = vpack.c.b16 %v280, %v279
  %v295 = vpack.c.b16 %v282, %v281
  %v296 = vpack.c.b16 %v284, %v283
  %v297 = vpack.c.b16 %v286, %v285
  %v298 = vpack.c.b16 %v288, %v287
  %v299 = vpack.c.b16 %v290, %v289
  %v300 = vpack.c.b16 %v292, %v291
  %309 = vmatpush.bf16.msra.mxu0 %v300
  %310 = vmatpush.bf16.msra.mxu0 %v299
  %311 = vmatpush.bf16.msra.mxu0 %v298
  %312 = vmatpush.bf16.msra.mxu0 %v297
  %313 = vmatpush.bf16.msra.mxu0 %v296
  %314 = vmatpush.bf16.msra.mxu0 %v295
  %315 = vmatpush.bf16.msra.mxu0 %v294
  %316 = vmatpush.bf16.msra.mxu0 %v293
  %317 = vmatmul.bf16.gmra.mxu0 %v157
  %v318 = vpop.f32.mrf.mxu0
  %v319 = vadd.f32 %v259, %v318
  %v320 = vpop.f32.mrf.mxu0
  %321 = vdwg.mxu0
  %vm322 = vcmask 15360
  %323 = vst.msk [vmem:[%s10] sm:$0xff] %vm322, %v319
  // Predicated region
  $region38: #{rankup_forward.1} parent=0 // pred_check
    _
  $region39: #{rankup_forward.1} parent=0 // pred_check_branch
    %325 = sbr.rel (0) target = $region41
  $region40: #{rankup_forward.1} parent=0 // pred_region
    _
  $region41: #{rankup_forward.1} parent=0 // pred_fallthru
    _
  // Predicated region
  $region42: #{rankup_forward.1} parent=0 // pred_check
    _
  $region43: #{rankup_forward.1} parent=0 // pred_check_branch
    %327 = sbr.rel (0) target = $region45
  $region44: #{rankup_forward.1} parent=0 // pred_region
    _
  $region45: #{rankup_forward.1} parent=0 // pred_fallthru
    _
  // Predicated region
  $region46: #{rankup_forward.1} parent=0 // pred_check
    _
  $region47: #{rankup_forward.1} parent=0 // pred_check_branch
    %329 = sbr.rel (0) target = $region49
  $region48: #{rankup_forward.1} parent=0 // pred_region
    _
  $region49: #{rankup_forward.1} parent=0 // pred_fallthru
    _
  // Predicated region
  $region50: #{rankup_forward.1} parent=0 // pred_check
    _
  $region51: #{rankup_forward.1} parent=0 // pred_check_branch
    %331 = sbr.rel (0) target = $region53
  $region52: #{rankup_forward.1} parent=0 // pred_region
    _
  $region53: #{rankup_forward.1} parent=0 // pred_fallthru
    _

</llo_original>
